<compile_context>
chip_gen: v7x
topology: tpu7x:2x2x1
jax: 0.10.0
libtpu: 0.0.40
codegen_flags: <defaults>
</compile_context>

<pallas_src>
import numpy as np
import jax
import jax.numpy as jnp
from jax.experimental import pallas as pl
from jax.experimental.pallas import tpu as pltpu


def _round_up(a: int, b: int) -> int:
    return ((a + b - 1) // b) * b


def _hann_periodic(n: int) -> np.ndarray:
    # scipy.signal.get_window('hann', n, fftbins=True)
    i = np.arange(n, dtype=np.float64)
    return (0.5 - 0.5 * np.cos(2.0 * np.pi * i / n)).astype(np.float32)


def _make_fused_basis(n_fft: int, window: np.ndarray) -> np.ndarray:
    """Fused analysis-window * one-sided DFT * Hermitian iDFT * synthesis-window.

    Compact packing [Re(k=0..N/2) | Im(k=1..N/2-1)] fills exactly n_fft
    columns/rows, so both bases are (n_fft, n_fft) and their product is the
    single map applied per frame.  Since the one-sided real DFT round trip is
    the identity on real frames, B_comb == diag(w*w) (checked below)."""
    assert n_fft % 2 == 0
    F = n_fft // 2 + 1
    n = np.arange(n_fft)[:, None].astype(np.float64)
    k = np.arange(F)[None, :].astype(np.float64)
    ang = 2.0 * np.pi * n * k / n_fft                       # (n_fft, F)
    w = window.astype(np.float64)

    # forward: frame @ b_fwd -> [Re X[0..N/2] | Im X[1..N/2-1]]
    b_fwd = np.concatenate(
        [w[:, None] * np.cos(ang),                          # (n_fft, F)
         -(w[:, None] * np.sin(ang[:, 1:F - 1]))],          # (n_fft, F-2)
        axis=1)                                             # (n_fft, n_fft)

    # inverse (Hermitian one-sided irDFT) with synthesis window folded in
    wk = np.full((F,), 2.0, np.float64)
    wk[0] = 1.0
    wk[-1] = 1.0
    inv_re = (wk[:, None] * np.cos(ang).T / n_fft) * w[None, :]          # (F, n_fft)
    inv_im = (-2.0 * np.sin(ang[:, 1:F - 1]).T / n_fft) * w[None, :]     # (F-2, n_fft)
    b_inv = np.concatenate([inv_re, inv_im], axis=0)                     # (n_fft, n_fft)

    b_comb = b_fwd @ b_inv
    # fwd o inv is the identity on real frames -> windowed projection is diag(w^2)
    assert np.allclose(b_comb, np.diag(w * w), atol=1e-8)
    return b_comb.astype(np.float32)


def _fused_kernel(frames_ref, bcomb_ref, out_ref):
    # Single MXU pass: (tm, n_fft) @ (n_fft, n_fft), f32 accumulation.
    out_ref[...] = jnp.dot(frames_ref[...], bcomb_ref[...],
                           preferred_element_type=jnp.float32
                           ).astype(out_ref.dtype)


def torch_stft_forward(x, *, filter_length=128, hop_length=32, win_length=128,
                       tm_max=2048):
    """Equivalent of TorchSTFT(filter_length, hop_length, win_length).forward(x).

    x: (B, T) float32.  Returns (B, 1, hop_length * (T // hop_length))."""
    n_fft = filter_length
    hop = hop_length
    assert n_fft % 2 == 0
    assert n_fft % hop == 0, "reshape-based framing/OLA assumes hop | n_fft"
    assert win_length <= n_fft
    B, T = x.shape
    in_dtype = x.dtype
    pad = n_fft // 2
    assert T > pad, "reflect padding (torch.stft center=True) needs T > n_fft//2"

    # hann window, centre-padded to n_fft (as torch.stft does)
    win = _hann_periodic(win_length)
    window = np.zeros(n_fft, np.float32)
    off = (n_fft - win_length) // 2
    window[off:off + win_length] = win

    ratio = n_fft // hop

    # --- framing (torch.stft center=True, reflect pad), gather-free ---------
    x32 = x.astype(jnp.float32)
    xp = jnp.pad(x32, ((0, 0), (pad, pad)), mode="reflect")       # (B, Lp)
    Lp = T + 2 * pad
    n_frames = 1 + (Lp - n_fft) // hop
    n_chunks = n_frames + ratio - 1        # (n_frames-1)*hop + n_fft == n_chunks*hop
    xc = xp[:, :n_chunks * hop].reshape(B, n_chunks, hop)
    frames = jnp.concatenate([xc[:, j:j + n_frames, :] for j in range(ratio)],
                             axis=2)                              # (B, n_frames, n_fft)
    M = B * n_frames
    frames_flat = frames.reshape(M, n_fft)

    # --- row tile: big, multiple of 8, >= 2 grid steps for v7x megacore -----
    tm = max(8, min(tm_max, _round_up(M, 8)))
    if M >= 16 and pl.cdiv(M, tm) < 2:
        tm = max(8, _round_up(pl.cdiv(M, 2), 8))
    grid = (pl.cdiv(M, tm),)

    b_comb = jnp.asarray(_make_fused_basis(n_fft, window))

    # --- Pallas hot path: one matmul per tile --------------------------------
    out_frames = pl.pallas_call(
        _fused_kernel,
        out_shape=jax.ShapeDtypeStruct((M, n_fft), jnp.float32),
        grid=grid,
        in_specs=[
            pl.BlockSpec((tm, n_fft), lambda i: (i, 0)),      # framed signal
            pl.BlockSpec((n_fft, n_fft), lambda i: (0, 0)),   # fused basis
        ],
        out_specs=pl.BlockSpec((tm, n_fft), lambda i: (i, 0)),
        compiler_params=pltpu.CompilerParams(
            dimension_semantics=("parallel",)),
    )(frames_flat, b_comb)

    out_frames = out_frames.reshape(B, n_frames, n_fft)

    # --- overlap-add via `ratio` shifted dense adds (no scatter) ------------
    acc = None
    for j in range(ratio):
        pj = out_frames[:, :, j * hop:(j + 1) * hop]                  # (B, n_frames, hop)
        pj = jnp.pad(pj, ((0, 0), (j, ratio - 1 - j), (0, 0)))        # (B, n_chunks, hop)
        acc = pj if acc is None else acc + pj
    y = acc.reshape(B, n_chunks * hop)                                # (B, Lp')

    out_len = hop * (n_frames - 1)              # torch.istft default length

    # --- window-envelope normalisation, precomputed on host (static) --------
    w2 = window.astype(np.float64) ** 2
    wss = np.zeros(n_chunks * hop, np.float64)
    for f in range(n_frames):
        wss[f * hop: f * hop + n_fft] += w2
    wss = wss[pad:pad + out_len]
    inv_wss = np.where(wss > 1e-11, 1.0 / np.maximum(wss, 1e-11), 1.0)
    inv_wss = jnp.asarray(inv_wss.astype(np.float32))

    y = y[:, pad:pad + out_len] * inv_wss[None, :]

    # .unsqueeze(-2) -> (B, 1, out_len), cast back to input dtype
    return y[:, None, :].astype(in_dtype)


if __name__ == "__main__":
    key = jax.random.PRNGKey(0)
    B, T = 2, 512
    x = jax.random.normal(key, (B, T), dtype=jnp.float32)

    y = torch_stft_forward(x, filter_length=128, hop_length=32, win_length=128)
    y = jax.block_until_ready(y)

    assert y.shape == (B, 1, T), y.shape
    # STFT -> iSTFT with a hann window and 75% overlap satisfies COLA, so the
    # forward pass is (near) perfect reconstruction; sanity-check the round trip.
    err = float(jnp.max(jnp.abs(y[:, 0, :] - x)))
    assert err < 1e-2, f"reconstruction error too large: {err}"
    print("KERNEL_OK")
</pallas_src>

<mosaic_0001>
module attributes {stable_mosaic.version = 11 : i64} {
  func.func @_fused_kernel(%arg0: i32, %arg1: memref<24x128xf32, #tpu.memory_space<vmem>>, %arg2: memref<128x128xf32, #tpu.memory_space<vmem>>, %arg3: memref<24x128xf32, #tpu.memory_space<vmem>>) attributes {dimension_semantics = [#tpu.dimension_semantics<parallel>], iteration_bounds = array<i64: 2>, scalar_prefetch = 0 : i64, scratch_operands = 0 : i64, tpu.core_type = #tpu.core_type<tc>, window_params = [{transform_indices = @transform_0, window_bounds = array<i64: 24, 128>}, {pipeline_mode = #tpu.pipeline_mode<synchronous>, transform_indices = @transform_1, window_bounds = array<i64: 128, 128>}, {transform_indices = @transform_2, window_bounds = array<i64: 24, 128>}]} {
    %c0 = arith.constant 0 : index
    %c0_0 = arith.constant 0 : index
    %0 = vector.load %arg1[%c0, %c0_0] : memref<24x128xf32, #tpu.memory_space<vmem>>, vector<24x128xf32>
    %c0_1 = arith.constant 0 : index
    %c0_2 = arith.constant 0 : index
    %1 = vector.load %arg2[%c0_1, %c0_2] : memref<128x128xf32, #tpu.memory_space<vmem>>, vector<128x128xf32>
    %cst = arith.constant dense<0.000000e+00> : vector<24x128xf32>
    %2 = tpu.matmul %0, %1, %cst {dimension_numbers = #tpu.dot_dimension_numbers<[1], [0], [0], [1], [0, 0, 1, 1], [], []>} : vector<24x128xf32>, vector<128x128xf32>, vector<24x128xf32> -> vector<24x128xf32>
    %c0_3 = arith.constant 0 : index
    %c0_4 = arith.constant 0 : index
    %3 = vector.load %arg3[%c0_3, %c0_4] : memref<24x128xf32, #tpu.memory_space<vmem>>, vector<24x128xf32>
    tpu.vector_store %arg3[%c0_3, %c0_4], %2 {strides = array<i32>} : memref<24x128xf32, #tpu.memory_space<vmem>>, vector<24x128xf32>,
    return
  }
  func.func @transform_0(%arg0: i32) -> (i32, i32) {
    %c0_i32 = arith.constant 0 : i32
    %c0_i32_0 = arith.constant 0 : i32
    return %arg0, %c0_i32 : i32, i32
  }
  func.func @transform_1(%arg0: i32) -> (i32, i32) {
    %c0_i32 = arith.constant 0 : i32
    %c0_i32_0 = arith.constant 0 : i32
    %c0_i32_1 = arith.constant 0 : i32
    return %c0_i32, %c0_i32_0 : i32, i32
  }
  func.func @transform_2(%arg0: i32) -> (i32, i32) {
    %c0_i32 = arith.constant 0 : i32
    %c0_i32_0 = arith.constant 0 : i32
    return %arg0, %c0_i32 : i32, i32
  }
}

</mosaic_0001>

<llo_original>
// kernel: tpu_custom_call.1
$region0: #{tpu_custom_call.1}
  #allocation0 [shape = 'u32[]', space=smem, size = 0x4, offset = 0x4, fixed_abs, tag = 'smem constant byte address 0x4 - core index']
  #allocation1 [shape = 'u32[144,128]{1,0:T(1,128)}', space=vmem, size = 0x12000, scoped, tag = 'internal scratch']
  %s0 = inlined_call_operand.hbm [shape: f32[34,128], index: 0, kind: input, shape index: {}]
  %s1 = inlined_call_operand.hbm [shape: f32[128,128], index: 1, kind: input, shape index: {}]
  %s2 = inlined_call_operand.hbm [shape: f32[34,128], index: 2, kind: output, shape index: {}]
  %s3 = sld [smem:[#allocation0]]
  $region49: #{tpu_custom_call.1} parent=0
    _
  %s5 = ssub.s32 1, %s3
  %s6 = scalar_select 0, %s5, %s3
  $region1: #{tpu_custom_call.1} parent=0
    #allocation2 [shape = 'u8[24576]{0}', space=vmem, size = 0x6000, scoped, tag = 'input window, operand 0']
    #allocation3 [shape = 's32[2]{0}', space=sflag, size = 0x8, scoped, tag = 'scoped memory for tpu_custom_call.1']
    #allocation4 [shape = 's32[2]{0}', space=sflag, size = 0x8, scoped, tag = 'scoped memory for tpu_custom_call.1']
    #allocation5 [shape = 'u8[65536]{0}', space=vmem, size = 0x10000, scoped, tag = 'input window, operand 1, single buffered']
    #allocation6 [shape = 's32[1]{0}', space=sflag, size = 0x4, scoped, tag = 'scoped memory for tpu_custom_call.1']
    #allocation7 [shape = 'u8[24576]{0}', space=vmem, size = 0x6000, scoped, tag = 'output window, operand 0']
    %7 = vsyncpa [#allocation3], 0
    %s8 = scalar_lea.sflag [#allocation3], 1
    %9 = vsyncpa %s8, 0
    %10 = vsyncpa [#allocation6], 0
    %11 = vsyncpa [#allocation4], 0
    %s12 = scalar_lea.sflag [#allocation4], 1
    %13 = vsyncpa %s12, 0
    loop: start=0, step=1, limit=4
    $region2: #{tpu_custom_call.1} parent=1 // loop_pre_header
      _
    $region3: #{tpu_custom_call.1} parent=1 // loop_header
      %s15 = sphi 0, %s19
      %p16 = scmp.ge.s32.totalorder %s15, 4
      %s25 = sphi 0, %s27
      %s28 = sphi 0, %s25
      %s29 = sphi 0, %s28
      %s45 = sphi 0, %s29
      %s49 = sphi 0, %s49
      %s51 = sphi 0, %s49
      %s52 = sphi 0, %s51
      %s66 = sphi 0, %s52
      %s72 = sphi 0, %s74
      %s75 = sphi 0, %s72
      %s76 = sphi 0, %s75
      %s92 = sphi 0, %s76
    $region4: #{tpu_custom_call.1} parent=1 // loop_header_branch
      %18 = sbr.rel (%p16) target = $region8
    $region5: #{tpu_custom_call.1} parent=1 // loop_body
      %s20 = ssub.s32 %s15, 1
      %s21 = ssub.s32 %s15, 2
      %s22 = sadd.s32 %s15, 1
      %s23 = ssub.s32 %s15, %s22
      %p24 = scmp.eq.s32.totalorder %s23, 0
      %s26 = sadd.s32 %s25, 1
      %s27 = scalar_select %p24, %s25, %s26
      %p30 = pneg %p24
      %p31 = scmp.eq.s32.totalorder %s15, 1
      %p32 = por %p30, %p31
      %p33 = scmp.ne.s32.totalorder %s25, %s28
      %p34 = scmp.eq.s32.totalorder %s15, 0
      %p35 = por %p33, %p34
      %p36 = scmp.ne.s32.totalorder %s25, %s28
      %p37 = scmp.eq.s32.totalorder %s20, 1
      %p38 = por %p36, %p37
      %p39 = scmp.ne.s32.totalorder %s28, %s29
      %p40 = scmp.eq.s32.totalorder %s20, 0
      %p41 = por %p39, %p40
      %p42 = scmp.ne.s32.totalorder %s28, %s29
      %p43 = scmp.eq.s32.totalorder %s21, 1
      %p44 = por %p42, %p43
      %p46 = scmp.ne.s32.totalorder %s29, %s45
      %p47 = scmp.eq.s32.totalorder %s21, 0
      %p48 = por %p46, %p47
      %s50 = sadd.s32 %s49, 1
      %p53 = scmp.eq.s32.totalorder %s15, 1
      %p54 = scmp.ne.s32.totalorder %s49, %s51
      %p55 = scmp.eq.s32.totalorder %s15, 0
      %p56 = por %p54, %p55
      %p57 = scmp.ne.s32.totalorder %s49, %s51
      %p58 = scmp.eq.s32.totalorder %s20, 1
      %p59 = por %p57, %p58
      %p60 = scmp.ne.s32.totalorder %s51, %s52
      %p61 = scmp.eq.s32.totalorder %s20, 0
      %p62 = por %p60, %p61
      %p63 = scmp.ne.s32.totalorder %s51, %s52
      %p64 = scmp.eq.s32.totalorder %s21, 1
      %p65 = por %p63, %p64
      %p67 = scmp.ne.s32.totalorder %s52, %s66
      %p68 = scmp.eq.s32.totalorder %s21, 0
      %p69 = por %p67, %p68
      %s70 = ssub.s32 %s15, %s22
      %p71 = scmp.eq.s32.totalorder %s70, 0
      %s73 = sadd.s32 %s72, 1
      %s74 = scalar_select %p71, %s72, %s73
      %p77 = pneg %p71
      %p78 = scmp.eq.s32.totalorder %s15, 1
      %p79 = por %p77, %p78
      %p80 = scmp.ne.s32.totalorder %s72, %s75
      %p81 = scmp.eq.s32.totalorder %s15, 0
      %p82 = por %p80, %p81
      %p83 = scmp.ne.s32.totalorder %s72, %s75
      %p84 = scmp.eq.s32.totalorder %s20, 1
      %p85 = por %p83, %p84
      %p86 = scmp.ne.s32.totalorder %s75, %s76
      %p87 = scmp.eq.s32.totalorder %s20, 0
      %p88 = por %p86, %p87
      %p89 = scmp.ne.s32.totalorder %s75, %s76
      %p90 = scmp.eq.s32.totalorder %s21, 1
      %p91 = por %p89, %p90
      %p93 = scmp.ne.s32.totalorder %s76, %s92
      %p94 = scmp.eq.s32.totalorder %s21, 0
      %p95 = por %p93, %p94
      %p96 = scmp.le.s32.totalorder 1, %s15
      %p97 = scmp.lt.s32.totalorder %s15, 3
      %p98 = pnand %p96, %p97
      %p99 = pneg %p98
      // Predicated region
      $region9: #{tpu_custom_call.1} parent=5 // pred_check
        _
      $region10: #{tpu_custom_call.1} parent=5 // pred_check_branch
        %101 = sbr.rel (%p98) target = $region12
      $region11: #{tpu_custom_call.1} parent=5 // pred_region
        %s102 = ssub.s32 %s15, 1
        // Predicated region
        $region13: #{tpu_custom_call.1} parent=11 // pred_check
          %p103 = pneg %p62
        $region14: #{tpu_custom_call.1} parent=11 // pred_check_branch
          %105 = sbr.rel (%p103) target = $region16
        $region15: #{tpu_custom_call.1} parent=11 // pred_region
          %s107 = ssub.s32 2048, 2048
          %108 = vsyncadd [#allocation6], %s107
          %s109 = sshll.u32 [#allocation5], 4
          %s110 = int_to_ptr.vmem [resolvable:$true] %s109
          %115 = dma.hbm_to_vmem [thread:$0]  %s1, 2048, %s110, [#allocation6], 128, 128, 8
        $region16: #{tpu_custom_call.1} parent=11 // pred_fallthru
          _
      $region12: #{tpu_custom_call.1} parent=5 // pred_fallthru
        _
      %p116 = scmp.lt.s32.totalorder %s15, 2
      // Predicated region
      $region17: #{tpu_custom_call.1} parent=5 // pred_check
        %p117 = pneg %p116
      $region18: #{tpu_custom_call.1} parent=5 // pred_check_branch
        %119 = sbr.rel (%p117) target = $region20
      $region19: #{tpu_custom_call.1} parent=5 // pred_region
        // Predicated region
        $region21: #{tpu_custom_call.1} parent=19 // pred_check
          %p120 = pneg %p35
        $region22: #{tpu_custom_call.1} parent=19 // pred_check_branch
          %122 = sbr.rel (%p120) target = $region24
        $region23: #{tpu_custom_call.1} parent=19 // pred_region
          %s123 = sand.u32 %s25, 1
          %s124 = scalar_lea.sflag [#allocation3], %s123
          %s125 = sand.u32 %s25, 1
          %s126 = smul.addr %s125, 24
          %s127 = scalar_lea.vmem [#allocation2], %s126
          %s128 = smul.u32 3, %s15
          %s129 = ssub.s32 5, %s128
          %p130 = scmp.lt.s32.totalorder %s129, 3
          %s131 = scalar_select %p130, %s129, 3
          %s132 = smul.u32 128, %s131
          %s134 = ssub.s32 384, %s132
          %135 = vsyncadd %s124, %s134
          %p136 = scmp.ne.s32.totalorder 0, %s132
          %s137 = smul.addr %s128, 128
          %s138 = scalar_lea.hbm %s0, %s137
          %s139 = smul.u32 8, %s131
          %s140 = sshll.u32 %s127, 4
          %s141 = int_to_ptr.vmem [resolvable:$true] %s140
          %s142 = sshll.u32 %s139, 4
          %146 = dma.hbm_to_vmem [thread:$0]  (%p136), %s138, %s142, %s141, %s124, 128, 128, 8
        $region24: #{tpu_custom_call.1} parent=19 // pred_fallthru
          _
      $region20: #{tpu_custom_call.1} parent=5 // pred_fallthru
        _
      %p147 = scmp.le.s32.totalorder 1, %s15
      %p148 = scmp.lt.s32.totalorder %s15, 3
      %p149 = pnand %p147, %p148
      %p150 = pneg %p149
      // Predicated region
      $region25: #{tpu_custom_call.1} parent=5 // pred_check
        _
      $region26: #{tpu_custom_call.1} parent=5 // pred_check_branch
        %152 = sbr.rel (%p149) target = $region28
      $region27: #{tpu_custom_call.1} parent=5 // pred_region
        %s153 = ssub.s32 %s15, 1
        %s154 = sand.u32 %s28, 1
        %s155 = scalar_lea.sflag [#allocation3], %s154
        %s156 = sand.u32 %s28, 1
        %s157 = smul.addr %s156, 24
        %s158 = scalar_lea.vmem [#allocation2], %s157
        // Predicated region
        $region29: #{tpu_custom_call.1} parent=27 // pred_check
          %p159 = pneg %p41
        $region30: #{tpu_custom_call.1} parent=27 // pred_check_branch
          %161 = sbr.rel (%p159) target = $region32
        $region31: #{tpu_custom_call.1} parent=27 // pred_region
          %162 = dma.done %s155, 384
        $region32: #{tpu_custom_call.1} parent=27 // pred_fallthru
          _
        // Predicated region
        $region33: #{tpu_custom_call.1} parent=27 // pred_check
          %p163 = pneg %p62
        $region34: #{tpu_custom_call.1} parent=27 // pred_check_branch
          %165 = sbr.rel (%p163) target = $region36
        $region35: #{tpu_custom_call.1} parent=27 // pred_region
          %166 = dma.done [#allocation6], 2048
        $region36: #{tpu_custom_call.1} parent=27 // pred_fallthru
          _
        %s167 = sand.u32 %s28, 1
        %s168 = scalar_lea.sflag [#allocation3], %s167
        %s169 = sand.u32 %s28, 1
        %s170 = smul.addr %s169, 24
        %s171 = scalar_lea.vmem [#allocation2], %s170
        %p172 = pneg %p41
        %p173 = pneg %p38
        %p174 = pneg %p62
        %p175 = pneg %p59
        %p176 = pneg %p88
        %p177 = pneg %p85
        %s178 = sand.u32 %s75, 1
        %s179 = scalar_lea.sflag [#allocation4], %s178
        %s180 = sand.u32 %s75, 1
        %s181 = smul.addr %s180, 24
        %s182 = scalar_lea.vmem [#allocation7], %s181
        %s183 = smul.u32 3, %s20
        %s184 = ssub.s32 5, %s183
        %p185 = scmp.lt.s32.totalorder %s184, 3
        %s186 = scalar_select %p185, %s184, 3
        %s187 = smul.u32 128, %s186
        %s188 = smul.u32 3, %s20
        %s189 = ssub.s32 5, %s188
        %p190 = scmp.lt.s32.totalorder %s189, 3
        %s191 = scalar_select %p190, %s189, 3
        %s192 = smul.u32 128, %s191
        %v193 = vld [vmem:[%s158] sm:$0xff]
        %v194 = vld [vmem:[%s158 + $0x8] sm:$0xff]
        %v195 = vld [vmem:[%s158 + $0x10] sm:$0xff]
        %v196 = vld [vmem:[#allocation5] sm:$0xff]
        %v197 = vld [vmem:[#allocation5 + $0x8] sm:$0xff]
        %v198 = vld [vmem:[#allocation5 + $0x10] sm:$0xff]
        %v199 = vld [vmem:[#allocation5 + $0x18] sm:$0xff]
        %v200 = vld [vmem:[#allocation5 + $0x20] sm:$0xff]
        %v201 = vld [vmem:[#allocation5 + $0x28] sm:$0xff]
        %v202 = vld [vmem:[#allocation5 + $0x30] sm:$0xff]
        %v203 = vld [vmem:[#allocation5 + $0x38] sm:$0xff]
        %v204 = vld [vmem:[#allocation5 + $0x40] sm:$0xff]
        %v205 = vld [vmem:[#allocation5 + $0x48] sm:$0xff]
        %v206 = vld [vmem:[#allocation5 + $0x50] sm:$0xff]
        %v207 = vld [vmem:[#allocation5 + $0x58] sm:$0xff]
        %v208 = vld [vmem:[#allocation5 + $0x60] sm:$0xff]
        %v209 = vld [vmem:[#allocation5 + $0x68] sm:$0xff]
        %v210 = vld [vmem:[#allocation5 + $0x70] sm:$0xff]
        %v211 = vld [vmem:[#allocation5 + $0x78] sm:$0xff]
        %212 = vmatprep.subr.mxu0 0.0
        %213 = vmatpush1.msra.mxu0 %v196
        %214 = vmatprep.subr.mxu0 0.0
        %215 = vmatpush1.msra.mxu0 %v197
        %216 = vmatprep.subr.mxu0 0.0
        %217 = vmatpush1.msra.mxu0 %v198
        %218 = vmatprep.subr.mxu0 0.0
        %219 = vmatpush1.msra.mxu0 %v199
        %220 = vmatprep.subr.mxu0 0.0
        %221 = vmatpush1.msra.mxu0 %v200
        %222 = vmatprep.subr.mxu0 0.0
        %223 = vmatpush1.msra.mxu0 %v201
        %224 = vmatprep.subr.mxu0 0.0
        %225 = vmatpush1.msra.mxu0 %v202
        %226 = vmatprep.subr.mxu0 0.0
        %227 = vmatpush1.msra.mxu0 %v203
        %228 = vmatprep.subr.mxu0 0.0
        %229 = vmatpush1.msra.mxu0 %v204
        %230 = vmatprep.subr.mxu0 0.0
        %231 = vmatpush1.msra.mxu0 %v205
        %232 = vmatprep.subr.mxu0 0.0
        %233 = vmatpush1.msra.mxu0 %v206
        %234 = vmatprep.subr.mxu0 0.0
        %235 = vmatpush1.msra.mxu0 %v207
        %236 = vmatprep.subr.mxu0 0.0
        %237 = vmatpush1.msra.mxu0 %v208
        %238 = vmatprep.subr.mxu0 0.0
        %239 = vmatpush1.msra.mxu0 %v209
        %240 = vmatprep.subr.mxu0 0.0
        %241 = vmatpush1.msra.mxu0 %v210
        %242 = vmatprep.subr.mxu0 0.0
        %243 = vmatpush1.msra.mxu0 %v211
        %244 = vmatprep.subr.mxu0 0.0
        %245 = vmatpush1.msra.mxu0 0.0
        %246 = vmatprep.subr.mxu0 0.0
        %247 = vmatpush1.msra.mxu0 0.0
        %248 = vmatprep.subr.mxu0 0.0
        %249 = vmatpush1.msra.mxu0 0.0
        %250 = vmatprep.subr.mxu0 0.0
        %251 = vmatpush1.msra.mxu0 0.0
        %252 = vmatprep.subr.mxu0 0.0
        %253 = vmatpush1.msra.mxu0 0.0
        %254 = vmatprep.subr.mxu0 0.0
        %255 = vmatpush1.msra.mxu0 0.0
        %256 = vmatprep.subr.mxu0 0.0
        %257 = vmatpush1.msra.mxu0 0.0
        %258 = vmatprep.subr.mxu0 0.0
        %259 = vmatpush1.msra.mxu0 0.0
        %260 = vmatprep.subr.mxu0 0.0
        %261 = vmatpush1.msra.mxu0 0.0
        %262 = vmatprep.subr.mxu0 0.0
        %263 = vmatpush1.msra.mxu0 0.0
        %264 = vmatprep.subr.mxu0 0.0
        %265 = vmatpush1.msra.mxu0 0.0
        %266 = vmatprep.subr.mxu0 0.0
        %267 = vmatpush1.msra.mxu0 0.0
        %268 = vmatprep.subr.mxu0 0.0
        %269 = vmatpush1.msra.mxu0 0.0
        %270 = vmatprep.subr.mxu0 0.0
        %271 = vmatpush1.msra.mxu0 0.0
        %272 = vmatprep.subr.mxu0 0.0
        %273 = vmatpush1.msra.mxu0 0.0
        %274 = vmatprep.subr.mxu0 0.0
        %275 = vmatpush1.msra.mxu0 0.0
        %276 = vmatprep.mubr.f32.mxu0 0.0
        %277 = vmatmul.mubr.f32.gmra.mrb[0].mxu0 %v193
        %v278 = vpop.f32.mrb[0].mxu0
        %v279 = vadd.f32 0.0, %v278
        %v280 = vpop.f32.mrb[0].mxu0
        %281 = vmatprep.mubr.f32.mxu0 0.0
        %282 = vmatmul.mubr.f32.gmra.mrb[0].mxu0 %v194
        %v283 = vpop.f32.mrb[0].mxu0
        %v284 = vadd.f32 0.0, %v283
        %v285 = vpop.f32.mrb[0].mxu0
        %286 = vmatprep.mubr.f32.mxu0 0.0
        %287 = vmatmul.mubr.f32.gmra.mrb[0].mxu0 %v195
        %v288 = vpop.f32.mrb[0].mxu0
        %v289 = vadd.f32 0.0, %v288
        %v290 = vpop.f32.mrb[0].mxu0
        %291 = vdwg.mxu0
        %292 = vst [vmem:[%s182] sm:$0xff] %v279
        %293 = vst [vmem:[%s182 + $0x8] sm:$0xff] %v284
        %294 = vst [vmem:[%s182 + $0x10] sm:$0xff] %v289
        %s295 = sand.u32 %s75, 1
        %s296 = scalar_lea.sflag [#allocation4], %s295
        %s297 = sand.u32 %s75, 1
        %s298 = smul.addr %s297, 24
        %s299 = scalar_lea.vmem [#allocation7], %s298
        // Predicated region
        $region37: #{tpu_custom_call.1} parent=27 // pred_check
          %p300 = pneg %p85
        $region38: #{tpu_custom_call.1} parent=27 // pred_check_branch
          %302 = sbr.rel (%p300) target = $region40
        $region39: #{tpu_custom_call.1} parent=27 // pred_region
          %s303 = smul.u32 3, %s20
          %s304 = ssub.s32 5, %s303
          %p305 = scmp.lt.s32.totalorder %s304, 3
          %s306 = scalar_select %p305, %s304, 3
          %s307 = smul.u32 128, %s306
          %s309 = ssub.s32 384, %s307
          %310 = vsyncadd %s296, %s309
          %p311 = scmp.ne.s32.totalorder 0, %s307
          %s312 = smul.addr %s303, 128
          %s313 = scalar_lea.hbm %s2, %s312
          %s314 = smul.u32 8, %s306
          %s315 = sshll.u32 %s299, 4
          %s316 = int_to_ptr.vmem [resolvable:$true] %s315
          %s317 = sshll.u32 %s314, 4
          %321 = dma.vmem_to_hbm [thread:$0]  (%p311), %s316, %s317, %s313, %s296, 128, 128, 8
        $region40: #{tpu_custom_call.1} parent=27 // pred_fallthru
          _
      $region28: #{tpu_custom_call.1} parent=5 // pred_fallthru
        _
      %p322 = scmp.le.s32.totalorder 2, %s15
      // Predicated region
      $region41: #{tpu_custom_call.1} parent=5 // pred_check
        %p323 = pneg %p322
      $region42: #{tpu_custom_call.1} parent=5 // pred_check_branch
        %325 = sbr.rel (%p323) target = $region44
      $region43: #{tpu_custom_call.1} parent=5 // pred_region
        %s326 = ssub.s32 %s15, 2
        // Predicated region
        $region45: #{tpu_custom_call.1} parent=43 // pred_check
          %p327 = pneg %p91
        $region46: #{tpu_custom_call.1} parent=43 // pred_check_branch
          %329 = sbr.rel (%p327) target = $region48
        $region47: #{tpu_custom_call.1} parent=43 // pred_region
          %s330 = sand.u32 %s76, 1
          %s331 = scalar_lea.sflag [#allocation4], %s330
          %s332 = sand.u32 %s76, 1
          %s333 = smul.addr %s332, 24
          %s334 = scalar_lea.vmem [#allocation7], %s333
          %335 = dma.done %s331, 384
        $region48: #{tpu_custom_call.1} parent=43 // pred_fallthru
          _
      $region44: #{tpu_custom_call.1} parent=5 // pred_fallthru
        _
    $region6: #{tpu_custom_call.1} parent=1 // loop_footer
      %s19 = sadd.s32 1, %s15
    $region7: #{tpu_custom_call.1} parent=1 // loop_footer_branch
      %14 = sbr.rel target = $region3
    $region8: #{tpu_custom_call.1} parent=1 // loop_exit
      _
    %336 = vsyncpa [#allocation3], 1
    %s337 = scalar_lea.sflag [#allocation3], 1
    %338 = vsyncpa %s337, 1
    %339 = vsyncpa [#allocation6], 1
    %340 = vsyncpa [#allocation4], 1
    %s341 = scalar_lea.sflag [#allocation4], 1
    %342 = vsyncpa %s341, 1

</llo_original>
